<compile_context>
chip_gen: v6e
topology: v6e:2x2x1
jax: 0.10.0
libtpu: 0.0.40
codegen_flags: <defaults>
</compile_context>

<pallas_src>
import functools

import jax
import jax.numpy as jnp
from jax.experimental import pallas as pl
from jax.experimental.pallas import tpu as pltpu


_ONEHOT_MAX_VOCAB = 4096   # one-hot MXU gather is the win for small vocabs
_GATHER_ROWS = 16          # rows gathered per grid step in the DMA-gather path


def _round_up(x, m):
    return (x + m - 1) // m * m


def _vmem_capacity_bytes():
    try:
        return int(pltpu.get_tpu_info().vmem_capacity_bytes)
    except Exception:
        return 64 * 1024 * 1024  # conservative default (v7x per-core VMEM)


# ----------------------------------------------------------------------------
# Path 1: small vocab -> resident table + one-hot matmul gather (MXU).
# ----------------------------------------------------------------------------
def _onehot_gather_kernel(idx_ref, table_ref, out_ref):
    # idx_ref:   (TQ, 1) int32  -- tile of flattened GPS indices.
    # table_ref: (num_gps, D)   -- full embedding table, resident in VMEM.
    # out_ref:   (TQ, D)        -- gathered embedding rows for this tile.
    idx = idx_ref[...]                                   # (TQ, 1)
    tq = idx.shape[0]
    num_gps = table_ref.shape[0]
    onehot = (idx == jax.lax.broadcasted_iota(jnp.int32, (tq, num_gps), 1))
    onehot = onehot.astype(table_ref.dtype)              # (TQ, num_gps), exact 0/1
    out_ref[...] = jnp.dot(
        onehot, table_ref[...], preferred_element_type=jnp.float32
    ).astype(out_ref.dtype)


def _gather_small_vocab(flat_idx, table, n_valid):
    num_gps, d = table.shape
    itemsize = jnp.dtype(table.dtype).itemsize
    n = flat_idx.shape[0]

    tq = 256 if n >= 256 else _round_up(max(n, 8), 8)
    n_pad = _round_up(n, tq)
    idx2d = jnp.pad(flat_idx, (0, n_pad - n)).reshape(n_pad, 1)

    table_bytes = num_gps * d * itemsize
    cap = _vmem_capacity_bytes()
    # Resident table + double-buffered idx/out tiles + one-hot tile + slack.
    need = table_bytes + 2 * tq * (d * itemsize + 4) + tq * num_gps * itemsize + (2 << 20)

    cost = pl.CostEstimate(
        flops=2 * n_pad * num_gps * d,
        transcendentals=0,
        bytes_accessed=table_bytes + n_pad * 4 + n_pad * d * itemsize,
    )
    out = pl.pallas_call(
        _onehot_gather_kernel,
        out_shape=jax.ShapeDtypeStruct((n_pad, d), table.dtype),
        grid_spec=pltpu.PrefetchScalarGridSpec(
            num_scalar_prefetch=0,
            grid=(n_pad // tq,),
            in_specs=[
                pl.BlockSpec((tq, 1), lambda i: (i, 0)),          # index tile
                pl.BlockSpec((num_gps, d), lambda i: (0, 0)),     # resident table
            ],
            out_specs=pl.BlockSpec((tq, d), lambda i: (i, 0)),
        ),
        compiler_params=pltpu.CompilerParams(
            dimension_semantics=("parallel",),
            vmem_limit_bytes=int(min(cap, max(need + (4 << 20), 32 << 20))),
        ),
        cost_estimate=cost,
    )(idx2d, table)
    return out[:n_valid]


# ----------------------------------------------------------------------------
# Path 2: large vocab -> manual multi-buffered DMA row gather from HBM.
# ----------------------------------------------------------------------------
def _dma_gather_kernel(idx_smem, table_hbm, out_ref, bufs, sems, *, rows):
    # idx_smem:  (N_pad,) int32  -- flattened indices (scalar-prefetched, SMEM).
    # table_hbm: (num_gps, D)    -- raw HBM ref (memory_space=pl.ANY).
    # out_ref:   (rows, D)       -- output tile for this grid step (VMEM).
    # bufs:      (2, rows, D)    -- two row-group slots (VMEM scratch).
    # sems:      (2,)            -- one byte-counting DMA sem per slot.
    step = pl.program_id(0)
    nsteps = pl.num_programs(0)

    def issue(s, slot):
        # Start `rows` independent row DMAs for step `s` into buffer `slot`.
        for r in range(rows):
            row = idx_smem[s * rows + r]
            pltpu.make_async_copy(
                table_hbm.at[pl.ds(row, 1), :],
                bufs.at[slot, pl.ds(r, 1), :],
                sems.at[slot],
            ).start()

    @pl.when(step == 0)
    def _():
        issue(0, 0)                       # prime slot 0

    slot = step % 2

    @pl.when(step + 1 < nsteps)
    def _():
        issue(step + 1, 1 - slot)         # prefetch next group while we drain this one

    # Single aggregate wait for all `rows` row-DMAs of the current slot
    # (semaphore counts bytes; descriptor covers the whole slot).
    pltpu.make_async_copy(bufs.at[slot], bufs.at[slot], sems.at[slot]).wait()

    out_ref[...] = bufs[slot]


def _gather_large_vocab(flat_idx, table, n_valid):
    num_gps, d = table.shape
    rows = _GATHER_ROWS
    n = flat_idx.shape[0]
    n_pad = _round_up(max(n, rows), rows)
    idx_pad = jnp.pad(flat_idx, (0, n_pad - n))

    out = pl.pallas_call(
        functools.partial(_dma_gather_kernel, rows=rows),
        out_shape=jax.ShapeDtypeStruct((n_pad, d), table.dtype),
        grid_spec=pltpu.PrefetchScalarGridSpec(
            num_scalar_prefetch=1,                      # flat indices -> SMEM
            grid=(n_pad // rows,),
            in_specs=[pl.BlockSpec(memory_space=pl.ANY)],   # table stays in HBM
            out_specs=pl.BlockSpec((rows, d), lambda i, idx: (i, 0)),
            scratch_shapes=[
                pltpu.VMEM((2, rows, d), table.dtype),
                pltpu.SemaphoreType.DMA((2,)),
            ],
        ),
        compiler_params=pltpu.CompilerParams(
            dimension_semantics=("arbitrary",),          # double-buffer state carries
        ),
    )(idx_pad, table)
    return out[:n_valid]


# ----------------------------------------------------------------------------
# Public wrapper — Pallas equivalent of GPSEmbeddings.forward.
# ----------------------------------------------------------------------------
def gps_embeddings_forward(gps_idx, embedding_table):
    """gps_idx: int array (any shape); embedding_table: (num_gps, D).
    Returns (*gps_idx.shape, D), identical to nn.Embedding(gps_idx)."""
    orig_shape = gps_idx.shape
    num_gps, d = embedding_table.shape
    flat_idx = gps_idx.reshape(-1).astype(jnp.int32)
    n = flat_idx.shape[0]

    itemsize = jnp.dtype(embedding_table.dtype).itemsize
    table_bytes = num_gps * d * itemsize
    cap = _vmem_capacity_bytes()
    resident_ok = (num_gps <= _ONEHOT_MAX_VOCAB) and (table_bytes <= int(0.5 * cap))

    if resident_ok:
        flat_out = _gather_small_vocab(flat_idx, embedding_table, n)
    else:
        flat_out = _gather_large_vocab(flat_idx, embedding_table, n)

    return flat_out.reshape(*orig_shape, d)


if __name__ == "__main__":
    key = jax.random.PRNGKey(0)
    k_table, k_idx, k_table2, k_idx2 = jax.random.split(key, 4)

    # --- Test 1: module-consistent small shapes (resident one-hot path) ------
    num_gps, embedding_dim = 64, 128
    batch, seq = 2, 8
    table = jax.random.normal(k_table, (num_gps, embedding_dim), dtype=jnp.float32)
    gps_idx = jax.random.randint(k_idx, (batch, seq), 0, num_gps, dtype=jnp.int32)

    out = jax.block_until_ready(gps_embeddings_forward(gps_idx, table))
    ref = table[gps_idx.reshape(-1)].reshape(batch, seq, embedding_dim)
    assert out.shape == (batch, seq, embedding_dim)
    assert jnp.allclose(out, ref), "Pallas one-hot embedding gather mismatch"

    # --- Test 2: large vocab (manual double-buffered DMA row-gather path) ----
    num_gps2, batch2, seq2 = 8192, 4, 64
    table2 = jax.random.normal(k_table2, (num_gps2, embedding_dim), dtype=jnp.float32)
    gps_idx2 = jax.random.randint(k_idx2, (batch2, seq2), 0, num_gps2, dtype=jnp.int32)

    out2 = jax.block_until_ready(gps_embeddings_forward(gps_idx2, table2))
    ref2 = table2[gps_idx2.reshape(-1)].reshape(batch2, seq2, embedding_dim)
    assert out2.shape == (batch2, seq2, embedding_dim)
    assert jnp.allclose(out2, ref2), "Pallas DMA-gather embedding mismatch"

    print("KERNEL_OK")
</pallas_src>

<mosaic_0001>
module attributes {stable_mosaic.version = 11 : i64} {
  func.func @_onehot_gather_kernel(%arg0: i32, %arg1: memref<16x1xi32, #tpu.memory_space<vmem>>, %arg2: memref<64x128xf32, #tpu.memory_space<vmem>>, %arg3: memref<16x128xf32, #tpu.memory_space<vmem>>) attributes {dimension_semantics = [#tpu.dimension_semantics<parallel>], iteration_bounds = array<i64: 1>, scalar_prefetch = 0 : i64, scratch_operands = 0 : i64, tpu.core_type = #tpu.core_type<tc>, window_params = [{transform_indices = @transform_0, window_bounds = array<i64: 16, 1>}, {pipeline_mode = #tpu.pipeline_mode<synchronous>, transform_indices = @transform_1, window_bounds = array<i64: 64, 128>}, {transform_indices = @transform_2, window_bounds = array<i64: 16, 128>}]} {
    %c0 = arith.constant 0 : index
    %c0_0 = arith.constant 0 : index
    %0 = vector.load %arg1[%c0, %c0_0] : memref<16x1xi32, #tpu.memory_space<vmem>>, vector<16x1xi32>
    %1 = tpu.iota {dimensions = array<i32: 1>} : vector<16x64xi32>
    %2 = vector.broadcast %0 : vector<16x1xi32> to vector<16x64xi32>
    %3 = arith.cmpi eq, %2, %1 : vector<16x64xi32>
    %4 = arith.extui %3 : vector<16x64xi1> to vector<16x64xi32>
    %5 = arith.sitofp %4 : vector<16x64xi32> to vector<16x64xf32>
    %c0_1 = arith.constant 0 : index
    %c0_2 = arith.constant 0 : index
    %6 = vector.load %arg2[%c0_1, %c0_2] : memref<64x128xf32, #tpu.memory_space<vmem>>, vector<64x128xf32>
    %cst = arith.constant dense<0.000000e+00> : vector<16x128xf32>
    %7 = tpu.matmul %5, %6, %cst {dimension_numbers = #tpu.dot_dimension_numbers<[1], [0], [0], [1], [0, 0, 1, 1], [], []>} : vector<16x64xf32>, vector<64x128xf32>, vector<16x128xf32> -> vector<16x128xf32>
    %c0_3 = arith.constant 0 : index
    %c0_4 = arith.constant 0 : index
    %8 = vector.load %arg3[%c0_3, %c0_4] : memref<16x128xf32, #tpu.memory_space<vmem>>, vector<16x128xf32>
    tpu.vector_store %arg3[%c0_3, %c0_4], %7 {strides = array<i32>} : memref<16x128xf32, #tpu.memory_space<vmem>>, vector<16x128xf32>,
    return
  }
  func.func @transform_0(%arg0: i32) -> (i32, i32) {
    %c0_i32 = arith.constant 0 : i32
    %c0_i32_0 = arith.constant 0 : i32
    return %arg0, %c0_i32 : i32, i32
  }
  func.func @transform_1(%arg0: i32) -> (i32, i32) {
    %c0_i32 = arith.constant 0 : i32
    %c0_i32_0 = arith.constant 0 : i32
    %c0_i32_1 = arith.constant 0 : i32
    return %c0_i32, %c0_i32_0 : i32, i32
  }
  func.func @transform_2(%arg0: i32) -> (i32, i32) {
    %c0_i32 = arith.constant 0 : i32
    %c0_i32_0 = arith.constant 0 : i32
    return %arg0, %c0_i32 : i32, i32
  }
}

</mosaic_0001>

<llo_original>
// kernel: tpu_custom_call.1
$region0: #{tpu_custom_call.1}
  #allocation0 [shape = 'u32[]', space=smem, size = 0x4, offset = 0x4, fixed_abs, tag = 'smem constant byte address 0x4 - core index']
  #allocation1 [shape = 'u32[144,128]{1,0:T(1,128)}', space=vmem, size = 0x12000, scoped, tag = 'internal scratch']
  %s0 = inlined_call_operand.vmem [shape: s32[16,1], index: 0, kind: input, shape index: {}]
  %s1 = inlined_call_operand.hbm [shape: f32[64,128], index: 1, kind: input, shape index: {}]
  %s2 = inlined_call_operand.hbm [shape: f32[16,128], index: 2, kind: output, shape index: {}]
  %s3 = sld [smem:[#allocation0]]
  $region22: #{tpu_custom_call.1} parent=0
    _
  %s5 = ssub.s32 1, %s3
  %s6 = scalar_select 0, %s5, %s3
  $region1: #{tpu_custom_call.1} parent=0
    #allocation2 [shape = 'u8[32768]{0}', space=vmem, size = 0x8000, scoped, tag = 'input window, operand 1, single buffered']
    #allocation3 [shape = 's32[1]{0}', space=sflag, size = 0x4, scoped, tag = 'scoped memory for tpu_custom_call.1']
    #allocation4 [shape = 's32[1]{0}', space=sflag, size = 0x4, scoped, tag = 'scoped memory for tpu_custom_call.1']
    #allocation5 [shape = 'u8[8192]{0}', space=vmem, size = 0x2000, scoped, tag = 'output window, operand 0, single buffered']
    %7 = vsyncpa [#allocation3], 0
    %8 = vsyncpa [#allocation4], 0
    // Predicated region
    $region2: #{tpu_custom_call.1} parent=1 // pred_check
      _
    $region3: #{tpu_custom_call.1} parent=1 // pred_check_branch
      %10 = sbr.rel (0) target = $region5
    $region4: #{tpu_custom_call.1} parent=1 // pred_region
      _
    $region5: #{tpu_custom_call.1} parent=1 // pred_fallthru
      _
    // Predicated region
    $region6: #{tpu_custom_call.1} parent=1 // pred_check
      _
    $region7: #{tpu_custom_call.1} parent=1 // pred_check_branch
      %12 = sbr.rel (0) target = $region9
    $region8: #{tpu_custom_call.1} parent=1 // pred_region
      %s14 = ssub.s32 1024, 1024
      %15 = vsyncadd [#allocation3], %s14
      %s16 = sshll.u32 [#allocation2], 4
      %s17 = int_to_ptr.vmem [resolvable:$true] %s16
      %22 = dma.hbm_to_vmem [thread:$0]  %s1, 1024, %s17, [#allocation3], 128, 128, 8
    $region9: #{tpu_custom_call.1} parent=1 // pred_fallthru
      _
    // Predicated region
    $region10: #{tpu_custom_call.1} parent=1 // pred_check
      _
    $region11: #{tpu_custom_call.1} parent=1 // pred_check_branch
      %24 = sbr.rel (0) target = $region13
    $region12: #{tpu_custom_call.1} parent=1 // pred_region
      %25 = dma.done [#allocation3], 1024
    $region13: #{tpu_custom_call.1} parent=1 // pred_fallthru
      _
    %v26 = vld [vmem:[%s0] sm:$0xff]
    %v27 = vld [vmem:[%s0 + $0x8] sm:$0xff]
    %v28 = vlaneseq
    %v29 = vand.u32 %v28, 127
    %30 = vset.pattern.permute.xlu0 0
    %31 = vperm.xlu0 %30, %v26
    %v32 = vpop.permute.xlu0 %31
    %33 = vset.pattern.permute.xlu0 0
    %34 = vperm.xlu0 %33, %v27
    %v35 = vpop.permute.xlu0 %34
    %vm36 = vcmp.eq.s32.totalorder %v32, %v29
    %vm37 = vcmp.eq.s32.totalorder %v35, %v29
    %v38 = vsel %vm36, 1, 0
    %v39 = vsel %vm37, 1, 0
    %v40 = vcvt.s32.f32 %v38
    %v41 = vcvt.s32.f32 %v39
    %v42 = vld [vmem:[#allocation2] sm:$0xff]
    %v43 = vld [vmem:[#allocation2 + $0x8] sm:$0xff]
    %v44 = vld [vmem:[#allocation2 + $0x10] sm:$0xff]
    %v45 = vld [vmem:[#allocation2 + $0x18] sm:$0xff]
    %v46 = vld [vmem:[#allocation2 + $0x20] sm:$0xff]
    %v47 = vld [vmem:[#allocation2 + $0x28] sm:$0xff]
    %v48 = vld [vmem:[#allocation2 + $0x30] sm:$0xff]
    %v49 = vld [vmem:[#allocation2 + $0x38] sm:$0xff]
    %vm50 = vcmask 523264
    %v52 = vsel %vm50, %v40, 0
    %v55 = vsel %vm50, %v41, 0
    %57 = vmatprep.subr.mxu0 0.0
    %58 = vmatpush1.msra.mxu0 0.0
    %59 = vmatprep.subr.mxu0 0.0
    %60 = vmatpush1.msra.mxu0 0.0
    %61 = vmatprep.subr.mxu0 0.0
    %62 = vmatpush1.msra.mxu0 0.0
    %63 = vmatprep.subr.mxu0 0.0
    %64 = vmatpush1.msra.mxu0 0.0
    %65 = vmatprep.subr.mxu0 0.0
    %66 = vmatpush1.msra.mxu0 0.0
    %67 = vmatprep.subr.mxu0 0.0
    %68 = vmatpush1.msra.mxu0 0.0
    %69 = vmatprep.subr.mxu0 0.0
    %70 = vmatpush1.msra.mxu0 0.0
    %71 = vmatprep.subr.mxu0 0.0
    %72 = vmatpush1.msra.mxu0 0.0
    %73 = vmatprep.subr.mxu0 0.0
    %74 = vmatpush1.msra.mxu0 %v49
    %75 = vmatprep.subr.mxu0 0.0
    %76 = vmatpush1.msra.mxu0 %v48
    %77 = vmatprep.subr.mxu0 0.0
    %78 = vmatpush1.msra.mxu0 %v47
    %79 = vmatprep.subr.mxu0 0.0
    %80 = vmatpush1.msra.mxu0 %v46
    %81 = vmatprep.subr.mxu0 0.0
    %82 = vmatpush1.msra.mxu0 %v45
    %83 = vmatprep.subr.mxu0 0.0
    %84 = vmatpush1.msra.mxu0 %v44
    %85 = vmatprep.subr.mxu0 0.0
    %86 = vmatpush1.msra.mxu0 %v43
    %87 = vmatprep.subr.mxu0 0.0
    %88 = vmatpush1.msra.mxu0 %v42
    %89 = vmatprep.subr.mxu0 0.0
    %90 = vmatpush2.msra.mxu0 0.0
    %91 = vmatprep.subr.mxu0 0.0
    %92 = vmatpush2.msra.mxu0 0.0
    %93 = vmatprep.subr.mxu0 0.0
    %94 = vmatpush2.msra.mxu0 0.0
    %95 = vmatprep.subr.mxu0 0.0
    %96 = vmatpush2.msra.mxu0 0.0
    %97 = vmatprep.subr.mxu0 0.0
    %98 = vmatpush2.msra.mxu0 0.0
    %99 = vmatprep.subr.mxu0 0.0
    %100 = vmatpush2.msra.mxu0 0.0
    %101 = vmatprep.subr.mxu0 0.0
    %102 = vmatpush2.msra.mxu0 0.0
    %103 = vmatprep.subr.mxu0 0.0
    %104 = vmatpush2.msra.mxu0 0.0
    %105 = vmatprep.subr.mxu0 0.0
    %106 = vmatpush2.msra.mxu0 0.0
    %107 = vmatprep.subr.mxu0 0.0
    %108 = vmatpush2.msra.mxu0 0.0
    %109 = vmatprep.subr.mxu0 0.0
    %110 = vmatpush2.msra.mxu0 0.0
    %111 = vmatprep.subr.mxu0 0.0
    %112 = vmatpush2.msra.mxu0 0.0
    %113 = vmatprep.subr.mxu0 0.0
    %114 = vmatpush2.msra.mxu0 0.0
    %115 = vmatprep.subr.mxu0 0.0
    %116 = vmatpush2.msra.mxu0 0.0
    %117 = vmatprep.subr.mxu0 0.0
    %118 = vmatpush2.msra.mxu0 0.0
    %119 = vmatprep.subr.mxu0 0.0
    %120 = vmatpush2.msra.mxu0 0.0
    %121 = vmatprep.mubr.f32.mxu0 0.0
    %122 = vmatmul.mubr.f32.gmra.mxu0 %v52
    %v123 = vpop.f32.mrf.mxu0
    %v124 = vadd.f32 0.0, %v123
    %v125 = vpop.f32.mrf.mxu0
    %126 = vmatprep.mubr.f32.mxu0 0.0
    %127 = vmatmul.mubr.f32.gmra.mxu0 %v55
    %v128 = vpop.f32.mrf.mxu0
    %v129 = vadd.f32 0.0, %v128
    %v130 = vpop.f32.mrf.mxu0
    %131 = vdwg.mxu0
    %132 = vst [vmem:[#allocation5] sm:$0xff] %v124
    %133 = vst [vmem:[#allocation5 + $0x8] sm:$0xff] %v129
    // Predicated region
    $region14: #{tpu_custom_call.1} parent=1 // pred_check
      _
    $region15: #{tpu_custom_call.1} parent=1 // pred_check_branch
      %135 = sbr.rel (0) target = $region17
    $region16: #{tpu_custom_call.1} parent=1 // pred_region
      %s137 = ssub.s32 256, 256
      %138 = vsyncadd [#allocation4], %s137
      %s139 = sshll.u32 [#allocation5], 4
      %s140 = int_to_ptr.vmem [resolvable:$true] %s139
      %145 = dma.vmem_to_hbm [thread:$0]  %s140, 256, %s2, [#allocation4], 128, 128, 8
    $region17: #{tpu_custom_call.1} parent=1 // pred_fallthru
      _
    // Predicated region
    $region18: #{tpu_custom_call.1} parent=1 // pred_check
      _
    $region19: #{tpu_custom_call.1} parent=1 // pred_check_branch
      %147 = sbr.rel (0) target = $region21
    $region20: #{tpu_custom_call.1} parent=1 // pred_region
      %148 = dma.done [#allocation4], 256
    $region21: #{tpu_custom_call.1} parent=1 // pred_fallthru
      _
    %149 = vsyncpa [#allocation3], 1
    %150 = vsyncpa [#allocation4], 1

</llo_original>
